<compile_context>
chip_gen: v7x
topology: tpu7x:2x2x1
jax: 0.10.0
libtpu: 0.0.40
codegen_flags: <defaults>
</compile_context>

<pallas_src>
import jax
import jax.numpy as jnp
from jax.experimental import pallas as pl
from jax.experimental.pallas import tpu as pltpu

_LANE = 128
_TM_CAP = 4096  # rows/tile: (4096,128) f32 block = 2 MiB; 2 in x 2 bufs = 8 MiB VMEM


def _round_up(x: int, mult: int) -> int:
    return ((x + mult - 1) // mult) * mult


def _mse_partial_kernel(pred_ref, tgt_ref, out_ref, acc_ref):
    """Per-chunk partial sum of squared differences.

    Grid = (chunks, steps).  acc_ref is an (8,128) f32 VMEM vector accumulator;
    per step we only do VPU elementwise work (diff, square, vreg-wise adds).
    The partial accumulator is written out once, on the chunk's last step.
    """
    step = pl.program_id(1)

    @pl.when(step == 0)
    def _():
        acc_ref[...] = jnp.zeros_like(acc_ref)

    diff = pred_ref[...].astype(jnp.float32) - tgt_ref[...].astype(jnp.float32)
    sq = diff * diff
    tm = sq.shape[0]
    # (tm,128) -> (tm//8, 8, 128); sum over the leading dim = vreg-wise VPU adds
    # (no cross-lane XLU reduce on the per-step hot path).
    acc_ref[...] += sq.reshape(tm // 8, 8, _LANE).sum(axis=0)

    @pl.when(step == pl.num_programs(1) - 1)
    def _():
        out_ref[0] = acc_ref[...]


def mse_loss_pallas(pred: jax.Array, target: jax.Array) -> jax.Array:
    """MSE loss (mean reduction) over all elements, computed in a Pallas kernel.

    For tiny (sub-VMEM) tensors plain `jnp.mean((a-b)**2)` would be faster than
    any kernel launch; the Pallas path is kept unconditional so the demo always
    exercises the kernel.
    """
    assert pred.shape == target.shape, (pred.shape, target.shape)
    total_n = pred.size
    if total_n == 0:
        return jnp.float32(0.0)

    # Minimum sublane multiple depends on dtype packing (f32:8, bf16:16, i8/fp8:32).
    itemsize = jnp.dtype(pred.dtype).itemsize
    sublane_mult = {4: 8, 2: 16, 1: 32}.get(itemsize, 8)

    # Flatten to 1-D; MSE is layout-invariant.
    pred_flat = pred.reshape(-1)
    tgt_flat = target.reshape(-1)

    # Rows of a lane-dense (m, 128) slab.
    m = -(-total_n // _LANE)

    # Row tile: as large as possible (per-step overhead amortization), capped so
    # 2 inputs x 2 pipeline buffers stay small vs. every chip's VMEM.
    tm = min(_TM_CAP, _round_up(m, sublane_mult))  # _TM_CAP is a multiple of 32

    steps_total = -(-m // tm)
    n_chunks = 2 if steps_total >= 2 else 1          # engage both TCs on v7x
    steps_per_chunk = -(-steps_total // n_chunks)
    m_padded = n_chunks * steps_per_chunk * tm
    n_padded = m_padded * _LANE

    # Zero-pad the tail (zeros contribute nothing to the sum of squares).
    if n_padded != total_n:
        pad = n_padded - total_n
        pred_flat = jnp.pad(pred_flat, (0, pad))
        tgt_flat = jnp.pad(tgt_flat, (0, pad))

    pred2 = pred_flat.reshape(m_padded, _LANE)
    tgt2 = tgt_flat.reshape(m_padded, _LANE)

    def row_block_map(c, s):
        return (c * steps_per_chunk + s, 0)

    partials = pl.pallas_call(
        _mse_partial_kernel,
        out_shape=jax.ShapeDtypeStruct((n_chunks, 8, _LANE), jnp.float32),
        grid_spec=pltpu.PrefetchScalarGridSpec(
            num_scalar_prefetch=0,
            grid=(n_chunks, steps_per_chunk),
            in_specs=[
                pl.BlockSpec((tm, _LANE), row_block_map),
                pl.BlockSpec((tm, _LANE), row_block_map),
            ],
            out_specs=pl.BlockSpec((1, 8, _LANE), lambda c, s: (c, 0, 0)),
            scratch_shapes=[pltpu.VMEM((8, _LANE), jnp.float32)],
        ),
        compiler_params=pltpu.CompilerParams(
            dimension_semantics=("parallel", "arbitrary"),
        ),
    )(pred2, tgt2)

    # Tiny final reduce (n_chunks*8*128 elements) + divide by the TRUE count.
    return jnp.sum(partials) / jnp.float32(total_n)


class LossModule:
    """JAX port of pytorch_toolbelt's LossModule dict adapter."""

    def __init__(self, output_key: str, target_key: str, loss_fn):
        self.output_key = output_key
        # (sic) the original code names this attribute `target_ley`
        self.target_ley = target_key
        self.loss_fn = loss_fn

    def __call__(self, outputs: dict, targets: dict) -> jax.Array:
        return self.loss_fn(outputs[self.output_key], targets[self.target_ley])


if __name__ == "__main__":
    key = jax.random.PRNGKey(0)
    k1, k2, k3, k4, k5, k6, k7, k8 = jax.random.split(key, 8)

    module = LossModule(output_key="logits", target_key="targets",
                        loss_fn=mse_loss_pallas)

    # --- small demo shapes (spec-consistent NCHW) -------------------------
    B, C, H, W = 2, 4, 16, 16
    logits = jax.random.normal(k1, (B, C, H, W), dtype=jnp.float32)
    labels = jax.random.normal(k2, (B, C, H, W), dtype=jnp.float32)
    loss = jax.block_until_ready(module({"logits": logits}, {"targets": labels}))
    ref = jnp.mean((logits - labels) ** 2)
    assert jnp.allclose(loss, ref, rtol=1e-4, atol=1e-6), (loss, ref)

    # --- larger shape: exercises big tiles + multi-chunk / multi-step grid -
    logits_l = jax.random.normal(k3, (8, 8, 128, 160), dtype=jnp.float32)
    labels_l = jax.random.normal(k4, (8, 8, 128, 160), dtype=jnp.float32)
    loss_l = jax.block_until_ready(
        module({"logits": logits_l}, {"targets": labels_l}))
    ref_l = jnp.mean((logits_l - labels_l) ** 2)
    assert jnp.allclose(loss_l, ref_l, rtol=1e-4, atol=1e-6), (loss_l, ref_l)

    # --- ragged shape: exercises the zero-padding path --------------------
    logits_r = jax.random.normal(k5, (3, 5, 7, 11), dtype=jnp.float32)
    labels_r = jax.random.normal(k6, (3, 5, 7, 11), dtype=jnp.float32)
    loss_r = jax.block_until_ready(
        module({"logits": logits_r}, {"targets": labels_r}))
    ref_r = jnp.mean((logits_r - labels_r) ** 2)
    assert jnp.allclose(loss_r, ref_r, rtol=1e-4, atol=1e-6), (loss_r, ref_r)

    # --- bf16 inputs: exercises sub-32-bit sublane tiling + f32 accumulation
    logits_b = jax.random.normal(k7, (2, 4, 32, 32), dtype=jnp.bfloat16)
    labels_b = jax.random.normal(k8, (2, 4, 32, 32), dtype=jnp.bfloat16)
    loss_b = jax.block_until_ready(
        module({"logits": logits_b}, {"targets": labels_b}))
    ref_b = jnp.mean((logits_b.astype(jnp.float32)
                      - labels_b.astype(jnp.float32)) ** 2)
    assert jnp.allclose(loss_b, ref_b, rtol=1e-2, atol=1e-3), (loss_b, ref_b)

    print("KERNEL_OK")
</pallas_src>

<mosaic_0001>
module attributes {stable_mosaic.version = 11 : i64} {
  func.func @_mse_partial_kernel(%arg0: i32, %arg1: i32, %arg2: memref<16x128xf32, #tpu.memory_space<vmem>>, %arg3: memref<16x128xf32, #tpu.memory_space<vmem>>, %arg4: memref<1x8x128xf32, #tpu.memory_space<vmem>>, %arg5: memref<8x128xf32, #tpu.memory_space<vmem>>) attributes {dimension_semantics = [#tpu.dimension_semantics<parallel>, #tpu.dimension_semantics<arbitrary>], iteration_bounds = array<i64: 1, 1>, scalar_prefetch = 0 : i64, scratch_operands = 1 : i64, tpu.core_type = #tpu.core_type<tc>, window_params = [{transform_indices = @transform_0, window_bounds = array<i64: 16, 128>}, {transform_indices = @transform_1, window_bounds = array<i64: 16, 128>}, {transform_indices = @transform_2, window_bounds = array<i64: 1, 8, 128>}]} {
    %c0_i32 = arith.constant 0 : i32
    %0 = arith.cmpi eq, %arg1, %c0_i32 : i32
    %1 = arith.extui %0 : i1 to i32
    %c0_i32_0 = arith.constant 0 : i32
    %2 = arith.cmpi ne, %1, %c0_i32_0 : i32
    scf.if %2 {
      %cst_10 = arith.constant 0.000000e+00 : f32
      %15 = vector.broadcast %cst_10 : f32 to vector<8x128xf32>
      %c0_11 = arith.constant 0 : index
      %c0_12 = arith.constant 0 : index
      %16 = vector.load %arg5[%c0_11, %c0_12] : memref<8x128xf32, #tpu.memory_space<vmem>>, vector<8x128xf32>
      tpu.vector_store %arg5[%c0_11, %c0_12], %15 {strides = array<i32>} : memref<8x128xf32, #tpu.memory_space<vmem>>, vector<8x128xf32>,
    } else {
    }
    %c0 = arith.constant 0 : index
    %c0_1 = arith.constant 0 : index
    %3 = vector.load %arg2[%c0, %c0_1] : memref<16x128xf32, #tpu.memory_space<vmem>>, vector<16x128xf32>
    %c0_2 = arith.constant 0 : index
    %c0_3 = arith.constant 0 : index
    %4 = vector.load %arg3[%c0_2, %c0_3] : memref<16x128xf32, #tpu.memory_space<vmem>>, vector<16x128xf32>
    %5 = arith.subf %3, %4 : vector<16x128xf32>
    %6 = arith.mulf %5, %5 : vector<16x128xf32>
    %c0_4 = arith.constant 0 : index
    %c0_5 = arith.constant 0 : index
    %7 = vector.load %arg5[%c0_4, %c0_5] : memref<8x128xf32, #tpu.memory_space<vmem>>, vector<8x128xf32>
    %8 = vector.shape_cast %6 : vector<16x128xf32> to vector<2x8x128xf32>
    %cst = arith.constant dense<0.000000e+00> : vector<8x128xf32>
    %9 = vector.multi_reduction <add>, %8, %cst [0] : vector<2x8x128xf32> to vector<8x128xf32>
    %10 = arith.addf %7, %9 : vector<8x128xf32>
    %c0_6 = arith.constant 0 : index
    %c0_7 = arith.constant 0 : index
    %11 = vector.load %arg5[%c0_6, %c0_7] : memref<8x128xf32, #tpu.memory_space<vmem>>, vector<8x128xf32>
    tpu.vector_store %arg5[%c0_6, %c0_7], %10 {strides = array<i32>} : memref<8x128xf32, #tpu.memory_space<vmem>>, vector<8x128xf32>,
    %c0_i32_8 = arith.constant 0 : i32
    %12 = arith.cmpi eq, %arg1, %c0_i32_8 : i32
    %13 = arith.extui %12 : i1 to i32
    %c0_i32_9 = arith.constant 0 : i32
    %14 = arith.cmpi ne, %13, %c0_i32_9 : i32
    scf.if %14 {
      %c0_10 = arith.constant 0 : index
      %c0_11 = arith.constant 0 : index
      %15 = vector.load %arg5[%c0_10, %c0_11] : memref<8x128xf32, #tpu.memory_space<vmem>>, vector<8x128xf32>
      %c0_12 = arith.constant 0 : index
      %c0_13 = arith.constant 0 : index
      %c0_14 = arith.constant 0 : index
      %16 = vector.load %arg4[%c0_12, %c0_13, %c0_14] : memref<1x8x128xf32, #tpu.memory_space<vmem>>, vector<1x8x128xf32>
      %17 = vector.shape_cast %16 : vector<1x8x128xf32> to vector<8x128xf32>
      %18 = vector.shape_cast %15 : vector<8x128xf32> to vector<1x8x128xf32>
      tpu.vector_store %arg4[%c0_12, %c0_13, %c0_14], %18 {strides = array<i32>} : memref<1x8x128xf32, #tpu.memory_space<vmem>>, vector<1x8x128xf32>,
    } else {
    }
    return
  }
  func.func @transform_0(%arg0: i32, %arg1: i32) -> (i32, i32) {
    %c1_i32 = arith.constant 1 : i32
    %0 = arith.muli %arg0, %c1_i32 : i32
    %1 = arith.addi %0, %arg1 : i32
    %c0_i32 = arith.constant 0 : i32
    %c0_i32_0 = arith.constant 0 : i32
    return %1, %c0_i32 : i32, i32
  }
  func.func @transform_1(%arg0: i32, %arg1: i32) -> (i32, i32) {
    %c1_i32 = arith.constant 1 : i32
    %0 = arith.muli %arg0, %c1_i32 : i32
    %1 = arith.addi %0, %arg1 : i32
    %c0_i32 = arith.constant 0 : i32
    %c0_i32_0 = arith.constant 0 : i32
    return %1, %c0_i32 : i32, i32
  }
  func.func @transform_2(%arg0: i32, %arg1: i32) -> (i32, i32, i32) {
    %c0_i32 = arith.constant 0 : i32
    %c0_i32_0 = arith.constant 0 : i32
    %c0_i32_1 = arith.constant 0 : i32
    return %arg0, %c0_i32, %c0_i32_0 : i32, i32, i32
  }
}

</mosaic_0001>

<llo_original>
// kernel: tpu_custom_call.1
$region0: #{tpu_custom_call.1}
  #allocation0 [shape = 'u32[]', space=smem, size = 0x4, offset = 0x4, fixed_abs, tag = 'smem constant byte address 0x4 - core index']
  #allocation1 [shape = 'u32[144,128]{1,0:T(1,128)}', space=vmem, size = 0x12000, scoped, tag = 'internal scratch']
  #allocation2 [shape = 'f32[8,128]{1,0:T(8,128)}', space=vmem, size = 0x1000, scoped, tag = 'scratch operand']
  %s0 = inlined_call_operand.hbm [shape: f32[16,128], index: 0, kind: input, shape index: {}]
  %s1 = inlined_call_operand.hbm [shape: f32[16,128], index: 1, kind: input, shape index: {}]
  %s2 = inlined_call_operand.hbm [shape: f32[1,8,128], index: 2, kind: output, shape index: {}]
  %s3 = sld [smem:[#allocation0]]
  $region34: #{tpu_custom_call.1} parent=0
    _
  %s5 = ssub.s32 1, %s3
  %s6 = scalar_select 0, %s5, %s3
  $region1: #{tpu_custom_call.1} parent=0
    #allocation3 [shape = 'u8[8192]{0}', space=vmem, size = 0x2000, scoped, tag = 'input window, operand 0, single buffered']
    #allocation4 [shape = 's32[1]{0}', space=sflag, size = 0x4, scoped, tag = 'scoped memory for tpu_custom_call.1']
    #allocation5 [shape = 's32[1]{0}', space=sflag, size = 0x4, scoped, tag = 'scoped memory for tpu_custom_call.1']
    #allocation6 [shape = 'u8[8192]{0}', space=vmem, size = 0x2000, scoped, tag = 'input window, operand 1, single buffered']
    #allocation7 [shape = 's32[1]{0}', space=sflag, size = 0x4, scoped, tag = 'scoped memory for tpu_custom_call.1']
    #allocation8 [shape = 'u8[4096]{0}', space=vmem, size = 0x1000, scoped, tag = 'output window, operand 0, single buffered']
    %7 = vsyncpa [#allocation4], 0
    %8 = vsyncpa [#allocation7], 0
    %9 = vsyncpa [#allocation5], 0
    // Predicated region
    $region2: #{tpu_custom_call.1} parent=1 // pred_check
      _
    $region3: #{tpu_custom_call.1} parent=1 // pred_check_branch
      %11 = sbr.rel (0) target = $region5
    $region4: #{tpu_custom_call.1} parent=1 // pred_region
      %s12 = sadd.s32 0, 0
      %s13 = smul.u32 2, %s12
      %s15 = ssub.s32 256, 256
      %16 = vsyncadd [#allocation4], %s15
      %s17 = smul.addr %s13, 128
      %s18 = scalar_lea.hbm %s0, %s17
      %s19 = sshll.u32 [#allocation3], 4
      %s20 = int_to_ptr.vmem [resolvable:$true] %s19
      %25 = dma.hbm_to_vmem [thread:$0]  %s18, 256, %s20, [#allocation4], 128, 128, 8
    $region5: #{tpu_custom_call.1} parent=1 // pred_fallthru
      _
    // Predicated region
    $region6: #{tpu_custom_call.1} parent=1 // pred_check
      _
    $region7: #{tpu_custom_call.1} parent=1 // pred_check_branch
      %27 = sbr.rel (0) target = $region9
    $region8: #{tpu_custom_call.1} parent=1 // pred_region
      %s28 = sadd.s32 0, 0
      %s29 = smul.u32 2, %s28
      %s31 = ssub.s32 256, 256
      %32 = vsyncadd [#allocation7], %s31
      %s33 = smul.addr %s29, 128
      %s34 = scalar_lea.hbm %s1, %s33
      %s35 = sshll.u32 [#allocation6], 4
      %s36 = int_to_ptr.vmem [resolvable:$true] %s35
      %41 = dma.hbm_to_vmem [thread:$0]  %s34, 256, %s36, [#allocation7], 128, 128, 8
    $region9: #{tpu_custom_call.1} parent=1 // pred_fallthru
      _
    // Predicated region
    $region10: #{tpu_custom_call.1} parent=1 // pred_check
      _
    $region11: #{tpu_custom_call.1} parent=1 // pred_check_branch
      %43 = sbr.rel (0) target = $region13
    $region12: #{tpu_custom_call.1} parent=1 // pred_region
      %44 = dma.done [#allocation4], 256
    $region13: #{tpu_custom_call.1} parent=1 // pred_fallthru
      _
    // Predicated region
    $region14: #{tpu_custom_call.1} parent=1 // pred_check
      _
    $region15: #{tpu_custom_call.1} parent=1 // pred_check_branch
      %46 = sbr.rel (0) target = $region17
    $region16: #{tpu_custom_call.1} parent=1 // pred_region
      %47 = dma.done [#allocation7], 256
    $region17: #{tpu_custom_call.1} parent=1 // pred_fallthru
      _
    %s48 = sadd.s32 0, 0
    %s49 = smul.u32 2, %s48
    %s50 = sadd.s32 0, 0
    %s51 = smul.u32 2, %s50
    %p52 = scmp.eq.s32.totalorder 0, 0
    // Predicated region
    $region18: #{tpu_custom_call.1} parent=1 // pred_check
      %p53 = pneg %p52
    $region19: #{tpu_custom_call.1} parent=1 // pred_check_branch
      %55 = sbr.rel (%p53) target = $region21
    $region20: #{tpu_custom_call.1} parent=1 // pred_region
      %56 = vst [vmem:[#allocation2] sm:$0xff] 0.0
    $region21: #{tpu_custom_call.1} parent=1 // pred_fallthru
      _
    %v57 = vld [vmem:[#allocation3] sm:$0xff]
    %v58 = vld [vmem:[#allocation3 + $0x8] sm:$0xff]
    %v59 = vld [vmem:[#allocation6] sm:$0xff]
    %v60 = vld [vmem:[#allocation6 + $0x8] sm:$0xff]
    %v61 = vsub.f32 %v57, %v59
    %v62 = vsub.f32 %v58, %v60
    %v63 = vmul.f32 %v61, %v61
    %v64 = vmul.f32 %v62, %v62
    %v65 = vld [vmem:[#allocation2] sm:$0xff]
    %v66 = vadd.f32 %v63, %v64
    %v67 = vadd.f32 %v65, %v66
    %68 = vst [vmem:[#allocation2] sm:$0xff] %v67
    // Predicated region
    $region22: #{tpu_custom_call.1} parent=1 // pred_check
      %p69 = pneg %p52
    $region23: #{tpu_custom_call.1} parent=1 // pred_check_branch
      %71 = sbr.rel (%p69) target = $region25
    $region24: #{tpu_custom_call.1} parent=1 // pred_region
      %v72 = vld [vmem:[#allocation2] sm:$0xff]
      %73 = vst [vmem:[#allocation8] sm:$0xff] %v72
    $region25: #{tpu_custom_call.1} parent=1 // pred_fallthru
      _
    // Predicated region
    $region26: #{tpu_custom_call.1} parent=1 // pred_check
      _
    $region27: #{tpu_custom_call.1} parent=1 // pred_check_branch
      %75 = sbr.rel (0) target = $region29
    $region28: #{tpu_custom_call.1} parent=1 // pred_region
      %s77 = ssub.s32 128, 128
      %78 = vsyncadd [#allocation5], %s77
      %s80 = sshll.u32 [#allocation8], 4
      %s81 = int_to_ptr.vmem [resolvable:$true] %s80
      %83 = dma.vmem_to_hbm [thread:$0]  %s81, 128, %s2, [#allocation5]
    $region29: #{tpu_custom_call.1} parent=1 // pred_fallthru
      _
    // Predicated region
    $region30: #{tpu_custom_call.1} parent=1 // pred_check
      _
    $region31: #{tpu_custom_call.1} parent=1 // pred_check_branch
      %85 = sbr.rel (0) target = $region33
    $region32: #{tpu_custom_call.1} parent=1 // pred_region
      %86 = dma.done [#allocation5], 128
    $region33: #{tpu_custom_call.1} parent=1 // pred_fallthru
      _
    %87 = vsyncpa [#allocation4], 1
    %88 = vsyncpa [#allocation7], 1
    %89 = vsyncpa [#allocation5], 1

</llo_original>
